<compile_context>
chip_gen: v7x
topology: tpu7x:2x2x1
jax: 0.10.0
libtpu: 0.0.40
codegen_flags: <defaults>
</compile_context>

<pallas_src>
import functools
import math

import jax
import jax.numpy as jnp
from jax import lax
from jax.experimental import pallas as pl
from jax.experimental.pallas import tpu as pltpu


def mha_kernel(x_ref, w_ref, b_ref, out_ref, *, num_heads, q_len):
    # x_ref:   (N, L+S, E)  rows 0:L per batch = query, rows L:L+S = key/value
    # w_ref:   (E, 4E)      [wq_scaled | wk | wv | wo], all (in, out)
    # b_ref:   (1, 4E)      [bq_scaled | bk | bv | bo]
    # out_ref: (N, L, E+S)  lanes 0:E = attn output, lanes E:E+S = avg weights
    N, T, E = x_ref.shape
    L = q_len
    S = T - L
    head_dim = E // num_heads
    inv_heads = 1.0 / num_heads

    x = x_ref[...].reshape(N * T, E)        # layout-preserving leading-dim merge
    w = w_ref[...]
    b = b_ref[...]

    # One fused input-projection matmul for q/k/v over all rows.  (The k/v
    # lanes of query rows and q lanes of key rows are unused filler — one
    # bigger MXU push is cheaper here than two serialized small ones.)
    proj = (jnp.dot(x, w[:, :3 * E], preferred_element_type=jnp.float32)
            + b[:, :3 * E])                  # (N*T, 3E)
    wo = w[:, 3 * E:]                        # (E, E)
    bo = b[:, 3 * E:]                        # (1, E)

    o_rows = []   # per-batch (L, E) head-concatenated attention context
    p_rows = []   # per-batch (L, S) head-averaged attention probabilities

    # N and num_heads are tiny and static -> fully unrolled Python loops.
    for bidx in range(N):
        qoff = bidx * T
        koff = qoff + L
        qb = proj[qoff:qoff + L, 0:E]            # (L, E), pre-scaled by 1/sqrt(hd)
        kb = proj[koff:koff + S, E:2 * E]        # (S, E)
        vb = proj[koff:koff + S, 2 * E:3 * E]    # (S, E)

        prob_sum = jnp.zeros((L, S), jnp.float32)
        oh_heads = []
        for h in range(num_heads):
            lo = h * head_dim
            hi = lo + head_dim
            qh = qb[:, lo:hi]                    # (L, hd)
            kh = kb[:, lo:hi]                    # (S, hd)
            vh = vb[:, lo:hi]                    # (S, hd)

            # Scores: contract head dims without materializing kh.T.
            s = lax.dot_general(qh, kh, (((1,), (1,)), ((), ())),
                                preferred_element_type=jnp.float32)   # (L, S)
            m = jnp.max(s, axis=-1, keepdims=True)
            e = jnp.exp(s - m)
            denom = jnp.sum(e, axis=-1, keepdims=True)
            p = e * pl.reciprocal(denom, approx=False)                # softmax
            prob_sum = prob_sum + p
            oh_heads.append(jnp.dot(p, vh, preferred_element_type=jnp.float32))

        o_rows.append(jnp.concatenate(oh_heads, axis=1))              # (L, E)
        p_rows.append(prob_sum * inv_heads)                           # (L, S)

    # Single output-projection matmul over all batches' rows (replaces the
    # per-head / per-batch accumulate of the previous version).
    o_all = jnp.concatenate(o_rows, axis=0)                           # (N*L, E)
    out_all = jnp.dot(o_all, wo, preferred_element_type=jnp.float32) + bo
    p_all = jnp.concatenate(p_rows, axis=0)                           # (N*L, S)

    # Single lane-contiguous writeback slab.
    fused = jnp.concatenate([out_all, p_all], axis=1)                 # (N*L, E+S)
    out_ref[...] = fused.reshape(N, L, E + S).astype(out_ref.dtype)


def prepare_params(params, *, num_heads):
    """One-time host-side weight prep: transpose to (in, out), fold the
    1/sqrt(head_dim) score scale into the query projection, and fuse ALL
    weights / biases into one (E, 4E) matrix and one (1, 4E) row."""
    E = params["wq"].shape[0]
    head_dim = E // num_heads
    scale = 1.0 / math.sqrt(head_dim)
    w = jnp.concatenate(
        [params["wq"].T * scale, params["wk"].T, params["wv"].T, params["wo"].T],
        axis=1)                                                       # (E, 4E)
    b = jnp.concatenate(
        [params["bq"] * scale, params["bk"], params["bv"], params["bo"]],
        axis=1)                                                       # (1, 4E)
    return {"w": w, "b": b}


def multihead_attention(x1, x2, prepped, *, num_heads):
    """x1: (L, N, E) query, x2: (S, N, E) key=value (torch seq-first layout).
    Returns (attn_out (L, N, E), attn_weights (N, L, S))."""
    L, N, E = x1.shape
    S = x2.shape[0]

    # Fuse both activations into one batch-first buffer: (N, L+S, E).
    x_cat = jnp.concatenate(
        [jnp.transpose(x1, (1, 0, 2)), jnp.transpose(x2, (1, 0, 2))], axis=1)

    kernel = functools.partial(mha_kernel, num_heads=num_heads, q_len=L)

    fused = pl.pallas_call(
        kernel,
        out_shape=jax.ShapeDtypeStruct((N, L, E + S), x1.dtype),
        in_specs=[
            pl.BlockSpec(memory_space=pltpu.MemorySpace.VMEM),   # x_cat
            pl.BlockSpec(memory_space=pltpu.MemorySpace.VMEM),   # fused weights
            pl.BlockSpec(memory_space=pltpu.MemorySpace.VMEM),   # fused biases
        ],
        out_specs=pl.BlockSpec(memory_space=pltpu.MemorySpace.VMEM),
    )(x_cat, prepped["w"], prepped["b"])

    out = jnp.transpose(fused[:, :, :E], (1, 0, 2))   # (L, N, E)
    attw = fused[:, :, E:]                            # (N, L, S)
    return out, attw


def init_params(key, embed_dim):
    """Deterministic parameter init mirroring MultiheadAttention's shapes:
    in_proj_weight (3E, E) split into wq/wk/wv, biases -> zeros, out_proj (E, E)."""
    k1, k2 = jax.random.split(key)
    bound = math.sqrt(6.0 / (embed_dim + embed_dim))   # xavier_uniform fan
    in_proj_w = jax.random.uniform(
        k1, (3 * embed_dim, embed_dim), jnp.float32, -bound, bound)
    out_w = jax.random.uniform(
        k2, (embed_dim, embed_dim), jnp.float32, -bound, bound)
    wq, wk, wv = jnp.split(in_proj_w, 3, axis=0)
    zeros_b = jnp.zeros((1, embed_dim), jnp.float32)
    return {
        "wq": wq, "wk": wk, "wv": wv,
        "bq": zeros_b, "bk": zeros_b, "bv": zeros_b,
        "wo": out_w, "bo": zeros_b,
    }


def reference_mha(x1, x2, params, *, num_heads):
    """Pure-JAX reference (uses the raw torch-layout params)."""
    L, N, E = x1.shape
    S = x2.shape[0]
    hd = E // num_heads
    xq = jnp.transpose(x1, (1, 0, 2))
    xk = jnp.transpose(x2, (1, 0, 2))
    q = xq @ params["wq"].T + params["bq"]
    k = xk @ params["wk"].T + params["bk"]
    v = xk @ params["wv"].T + params["bv"]
    qh = q.reshape(N, L, num_heads, hd).transpose(0, 2, 1, 3)
    kh = k.reshape(N, S, num_heads, hd).transpose(0, 2, 1, 3)
    vh = v.reshape(N, S, num_heads, hd).transpose(0, 2, 1, 3)
    s = jnp.einsum("nhld,nhsd->nhls", qh, kh) / math.sqrt(hd)
    p = jax.nn.softmax(s, axis=-1)
    o = jnp.einsum("nhls,nhsd->nhld", p, vh)
    o = o.transpose(0, 2, 1, 3).reshape(N, L, E)
    out = o @ params["wo"].T + params["bo"]
    return jnp.transpose(out, (1, 0, 2)), p.mean(axis=1)


if __name__ == "__main__":
    # embed_dim=8, num_heads=2 (head_dim=4); small seq/batch.
    L, S, N, E, H = 8, 16, 2, 8, 2

    key = jax.random.PRNGKey(0)
    kx1, kx2, kp = jax.random.split(key, 3)
    x1 = jax.random.normal(kx1, (L, N, E), jnp.float32)   # query   (L, N, E)
    x2 = jax.random.normal(kx2, (S, N, E), jnp.float32)   # key=val (S, N, E)
    params = init_params(kp, E)
    prepped = prepare_params(params, num_heads=H)          # one-time weight prep

    out, attw = multihead_attention(x1, x2, prepped, num_heads=H)
    jax.block_until_ready((out, attw))

    ref_out, ref_attw = reference_mha(x1, x2, params, num_heads=H)
    assert jnp.allclose(out, ref_out, atol=1e-5, rtol=1e-5)
    assert jnp.allclose(attw, ref_attw, atol=1e-5, rtol=1e-5)

    print("KERNEL_OK")
</pallas_src>

<mosaic_0001>
module attributes {stable_mosaic.version = 11 : i64} {
  func.func @mha_kernel(%arg0: memref<2x24x8xf32, #tpu.memory_space<vmem>>, %arg1: memref<8x32xf32, #tpu.memory_space<vmem>>, %arg2: memref<1x32xf32, #tpu.memory_space<vmem>>, %arg3: memref<2x8x24xf32, #tpu.memory_space<vmem>>) attributes {dimension_semantics = [], scalar_prefetch = 0 : i64, scratch_operands = 0 : i64, tpu.core_type = #tpu.core_type<tc>} {
    %c0 = arith.constant 0 : index
    %c0_0 = arith.constant 0 : index
    %c0_1 = arith.constant 0 : index
    %0 = vector.load %arg0[%c0, %c0_0, %c0_1] : memref<2x24x8xf32, #tpu.memory_space<vmem>>, vector<2x24x8xf32>
    %1 = vector.shape_cast %0 : vector<2x24x8xf32> to vector<48x8xf32>
    %c0_2 = arith.constant 0 : index
    %c0_3 = arith.constant 0 : index
    %2 = vector.load %arg1[%c0_2, %c0_3] : memref<8x32xf32, #tpu.memory_space<vmem>>, vector<8x32xf32>
    %c0_4 = arith.constant 0 : index
    %c0_5 = arith.constant 0 : index
    %3 = vector.load %arg2[%c0_4, %c0_5] : memref<1x32xf32, #tpu.memory_space<vmem>>, vector<1x32xf32>
    %4 = vector.extract_strided_slice %2 {offsets = [0, 0], sizes = [8, 24], strides = [1, 1]} : vector<8x32xf32> to vector<8x24xf32>
    %cst = arith.constant dense<0.000000e+00> : vector<48x24xf32>
    %5 = tpu.matmul %1, %4, %cst {dimension_numbers = #tpu.dot_dimension_numbers<[1], [0], [0], [1], [0, 0, 1, 1], [], []>} : vector<48x8xf32>, vector<8x24xf32>, vector<48x24xf32> -> vector<48x24xf32>
    %6 = vector.extract_strided_slice %3 {offsets = [0, 0], sizes = [1, 24], strides = [1, 1]} : vector<1x32xf32> to vector<1x24xf32>
    %7 = vector.broadcast %6 : vector<1x24xf32> to vector<48x24xf32>
    %8 = arith.addf %5, %7 : vector<48x24xf32>
    %9 = vector.extract_strided_slice %2 {offsets = [0, 24], sizes = [8, 8], strides = [1, 1]} : vector<8x32xf32> to vector<8x8xf32>
    %10 = vector.extract_strided_slice %3 {offsets = [0, 24], sizes = [1, 8], strides = [1, 1]} : vector<1x32xf32> to vector<1x8xf32>
    %11 = vector.extract_strided_slice %8 {offsets = [0, 0], sizes = [8, 8], strides = [1, 1]} : vector<48x24xf32> to vector<8x8xf32>
    %12 = vector.extract_strided_slice %8 {offsets = [8, 8], sizes = [16, 8], strides = [1, 1]} : vector<48x24xf32> to vector<16x8xf32>
    %13 = vector.extract_strided_slice %8 {offsets = [8, 16], sizes = [16, 8], strides = [1, 1]} : vector<48x24xf32> to vector<16x8xf32>
    %cst_6 = arith.constant 0.000000e+00 : f32
    %14 = vector.broadcast %cst_6 : f32 to vector<8x16xf32>
    %15 = vector.extract_strided_slice %11 {offsets = [0, 0], sizes = [8, 4], strides = [1, 1]} : vector<8x8xf32> to vector<8x4xf32>
    %16 = vector.extract_strided_slice %12 {offsets = [0, 0], sizes = [16, 4], strides = [1, 1]} : vector<16x8xf32> to vector<16x4xf32>
    %17 = vector.extract_strided_slice %13 {offsets = [0, 0], sizes = [16, 4], strides = [1, 1]} : vector<16x8xf32> to vector<16x4xf32>
    %cst_7 = arith.constant dense<0.000000e+00> : vector<8x16xf32>
    %18 = tpu.matmul %15, %16, %cst_7 {dimension_numbers = #tpu.dot_dimension_numbers<[1], [1], [0], [0], [0, 0, 1, 0], [], []>} : vector<8x4xf32>, vector<16x4xf32>, vector<8x16xf32> -> vector<8x16xf32>
    %cst_8 = arith.constant dense<0xFF800000> : vector<8xf32>
    %19 = vector.multi_reduction <maximumf>, %18, %cst_8 [1] : vector<8x16xf32> to vector<8xf32>
    %20 = vector.shape_cast %19 : vector<8xf32> to vector<8x1xf32>
    %21 = vector.broadcast %20 : vector<8x1xf32> to vector<8x16xf32>
    %22 = arith.subf %18, %21 : vector<8x16xf32>
    %23 = math.exp %22 : vector<8x16xf32>
    %cst_9 = arith.constant dense<0.000000e+00> : vector<8xf32>
    %24 = vector.multi_reduction <add>, %23, %cst_9 [1] : vector<8x16xf32> to vector<8xf32>
    %25 = vector.shape_cast %24 : vector<8xf32> to vector<8x1xf32>
    %26 = tpu.reciprocal %25 : vector<8x1xf32> -> vector<8x1xf32>
    %27 = vector.broadcast %26 : vector<8x1xf32> to vector<8x16xf32>
    %28 = arith.mulf %23, %27 : vector<8x16xf32>
    %29 = arith.addf %14, %28 : vector<8x16xf32>
    %cst_10 = arith.constant dense<0.000000e+00> : vector<8x4xf32>
    %30 = tpu.matmul %28, %17, %cst_10 {dimension_numbers = #tpu.dot_dimension_numbers<[1], [0], [0], [1], [0, 0, 1, 1], [], []>} : vector<8x16xf32>, vector<16x4xf32>, vector<8x4xf32> -> vector<8x4xf32>
    %31 = vector.extract_strided_slice %11 {offsets = [0, 4], sizes = [8, 4], strides = [1, 1]} : vector<8x8xf32> to vector<8x4xf32>
    %32 = vector.extract_strided_slice %12 {offsets = [0, 4], sizes = [16, 4], strides = [1, 1]} : vector<16x8xf32> to vector<16x4xf32>
    %33 = vector.extract_strided_slice %13 {offsets = [0, 4], sizes = [16, 4], strides = [1, 1]} : vector<16x8xf32> to vector<16x4xf32>
    %cst_11 = arith.constant dense<0.000000e+00> : vector<8x16xf32>
    %34 = tpu.matmul %31, %32, %cst_11 {dimension_numbers = #tpu.dot_dimension_numbers<[1], [1], [0], [0], [0, 0, 1, 0], [], []>} : vector<8x4xf32>, vector<16x4xf32>, vector<8x16xf32> -> vector<8x16xf32>
    %cst_12 = arith.constant dense<0xFF800000> : vector<8xf32>
    %35 = vector.multi_reduction <maximumf>, %34, %cst_12 [1] : vector<8x16xf32> to vector<8xf32>
    %36 = vector.shape_cast %35 : vector<8xf32> to vector<8x1xf32>
    %37 = vector.broadcast %36 : vector<8x1xf32> to vector<8x16xf32>
    %38 = arith.subf %34, %37 : vector<8x16xf32>
    %39 = math.exp %38 : vector<8x16xf32>
    %cst_13 = arith.constant dense<0.000000e+00> : vector<8xf32>
    %40 = vector.multi_reduction <add>, %39, %cst_13 [1] : vector<8x16xf32> to vector<8xf32>
    %41 = vector.shape_cast %40 : vector<8xf32> to vector<8x1xf32>
    %42 = tpu.reciprocal %41 : vector<8x1xf32> -> vector<8x1xf32>
    %43 = vector.broadcast %42 : vector<8x1xf32> to vector<8x16xf32>
    %44 = arith.mulf %39, %43 : vector<8x16xf32>
    %45 = arith.addf %29, %44 : vector<8x16xf32>
    %cst_14 = arith.constant dense<0.000000e+00> : vector<8x4xf32>
    %46 = tpu.matmul %44, %33, %cst_14 {dimension_numbers = #tpu.dot_dimension_numbers<[1], [0], [0], [1], [0, 0, 1, 1], [], []>} : vector<8x16xf32>, vector<16x4xf32>, vector<8x4xf32> -> vector<8x4xf32>
    %47 = tpu.concatenate %30, %46 in 1 : vector<8x4xf32>, vector<8x4xf32> -> vector<8x8xf32>
    %cst_15 = arith.constant 5.000000e-01 : f32
    %48 = vector.broadcast %cst_15 : f32 to vector<8x16xf32>
    %49 = arith.mulf %45, %48 : vector<8x16xf32>
    %50 = vector.extract_strided_slice %8 {offsets = [24, 0], sizes = [8, 8], strides = [1, 1]} : vector<48x24xf32> to vector<8x8xf32>
    %51 = vector.extract_strided_slice %8 {offsets = [32, 8], sizes = [16, 8], strides = [1, 1]} : vector<48x24xf32> to vector<16x8xf32>
    %52 = vector.extract_strided_slice %8 {offsets = [32, 16], sizes = [16, 8], strides = [1, 1]} : vector<48x24xf32> to vector<16x8xf32>
    %cst_16 = arith.constant 0.000000e+00 : f32
    %53 = vector.broadcast %cst_16 : f32 to vector<8x16xf32>
    %54 = vector.extract_strided_slice %50 {offsets = [0, 0], sizes = [8, 4], strides = [1, 1]} : vector<8x8xf32> to vector<8x4xf32>
    %55 = vector.extract_strided_slice %51 {offsets = [0, 0], sizes = [16, 4], strides = [1, 1]} : vector<16x8xf32> to vector<16x4xf32>
    %56 = vector.extract_strided_slice %52 {offsets = [0, 0], sizes = [16, 4], strides = [1, 1]} : vector<16x8xf32> to vector<16x4xf32>
    %cst_17 = arith.constant dense<0.000000e+00> : vector<8x16xf32>
    %57 = tpu.matmul %54, %55, %cst_17 {dimension_numbers = #tpu.dot_dimension_numbers<[1], [1], [0], [0], [0, 0, 1, 0], [], []>} : vector<8x4xf32>, vector<16x4xf32>, vector<8x16xf32> -> vector<8x16xf32>
    %cst_18 = arith.constant dense<0xFF800000> : vector<8xf32>
    %58 = vector.multi_reduction <maximumf>, %57, %cst_18 [1] : vector<8x16xf32> to vector<8xf32>
    %59 = vector.shape_cast %58 : vector<8xf32> to vector<8x1xf32>
    %60 = vector.broadcast %59 : vector<8x1xf32> to vector<8x16xf32>
    %61 = arith.subf %57, %60 : vector<8x16xf32>
    %62 = math.exp %61 : vector<8x16xf32>
    %cst_19 = arith.constant dense<0.000000e+00> : vector<8xf32>
    %63 = vector.multi_reduction <add>, %62, %cst_19 [1] : vector<8x16xf32> to vector<8xf32>
    %64 = vector.shape_cast %63 : vector<8xf32> to vector<8x1xf32>
    %65 = tpu.reciprocal %64 : vector<8x1xf32> -> vector<8x1xf32>
    %66 = vector.broadcast %65 : vector<8x1xf32> to vector<8x16xf32>
    %67 = arith.mulf %62, %66 : vector<8x16xf32>
    %68 = arith.addf %53, %67 : vector<8x16xf32>
    %cst_20 = arith.constant dense<0.000000e+00> : vector<8x4xf32>
    %69 = tpu.matmul %67, %56, %cst_20 {dimension_numbers = #tpu.dot_dimension_numbers<[1], [0], [0], [1], [0, 0, 1, 1], [], []>} : vector<8x16xf32>, vector<16x4xf32>, vector<8x4xf32> -> vector<8x4xf32>
    %70 = vector.extract_strided_slice %50 {offsets = [0, 4], sizes = [8, 4], strides = [1, 1]} : vector<8x8xf32> to vector<8x4xf32>
    %71 = vector.extract_strided_slice %51 {offsets = [0, 4], sizes = [16, 4], strides = [1, 1]} : vector<16x8xf32> to vector<16x4xf32>
    %72 = vector.extract_strided_slice %52 {offsets = [0, 4], sizes = [16, 4], strides = [1, 1]} : vector<16x8xf32> to vector<16x4xf32>
    %cst_21 = arith.constant dense<0.000000e+00> : vector<8x16xf32>
    %73 = tpu.matmul %70, %71, %cst_21 {dimension_numbers = #tpu.dot_dimension_numbers<[1], [1], [0], [0], [0, 0, 1, 0], [], []>} : vector<8x4xf32>, vector<16x4xf32>, vector<8x16xf32> -> vector<8x16xf32>
    %cst_22 = arith.constant dense<0xFF800000> : vector<8xf32>
    %74 = vector.multi_reduction <maximumf>, %73, %cst_22 [1] : vector<8x16xf32> to vector<8xf32>
    %75 = vector.shape_cast %74 : vector<8xf32> to vector<8x1xf32>
    %76 = vector.broadcast %75 : vector<8x1xf32> to vector<8x16xf32>
    %77 = arith.subf %73, %76 : vector<8x16xf32>
    %78 = math.exp %77 : vector<8x16xf32>
    %cst_23 = arith.constant dense<0.000000e+00> : vector<8xf32>
    %79 = vector.multi_reduction <add>, %78, %cst_23 [1] : vector<8x16xf32> to vector<8xf32>
    %80 = vector.shape_cast %79 : vector<8xf32> to vector<8x1xf32>
    %81 = tpu.reciprocal %80 : vector<8x1xf32> -> vector<8x1xf32>
    %82 = vector.broadcast %81 : vector<8x1xf32> to vector<8x16xf32>
    %83 = arith.mulf %78, %82 : vector<8x16xf32>
    %84 = arith.addf %68, %83 : vector<8x16xf32>
    %cst_24 = arith.constant dense<0.000000e+00> : vector<8x4xf32>
    %85 = tpu.matmul %83, %72, %cst_24 {dimension_numbers = #tpu.dot_dimension_numbers<[1], [0], [0], [1], [0, 0, 1, 1], [], []>} : vector<8x16xf32>, vector<16x4xf32>, vector<8x4xf32> -> vector<8x4xf32>
    %86 = tpu.concatenate %69, %85 in 1 : vector<8x4xf32>, vector<8x4xf32> -> vector<8x8xf32>
    %cst_25 = arith.constant 5.000000e-01 : f32
    %87 = vector.broadcast %cst_25 : f32 to vector<8x16xf32>
    %88 = arith.mulf %84, %87 : vector<8x16xf32>
    %89 = tpu.concatenate %47, %86 in 0 : vector<8x8xf32>, vector<8x8xf32> -> vector<16x8xf32>
    %cst_26 = arith.constant dense<0.000000e+00> : vector<16x8xf32>
    %90 = tpu.matmul %89, %9, %cst_26 {dimension_numbers = #tpu.dot_dimension_numbers<[1], [0], [0], [1], [0, 0, 1, 1], [], []>} : vector<16x8xf32>, vector<8x8xf32>, vector<16x8xf32> -> vector<16x8xf32>
    %91 = vector.broadcast %10 : vector<1x8xf32> to vector<16x8xf32>
    %92 = arith.addf %90, %91 : vector<16x8xf32>
    %93 = tpu.concatenate %49, %88 in 0 : vector<8x16xf32>, vector<8x16xf32> -> vector<16x16xf32>
    %94 = tpu.concatenate %92, %93 in 1 : vector<16x8xf32>, vector<16x16xf32> -> vector<16x24xf32>
    %95 = vector.shape_cast %94 : vector<16x24xf32> to vector<2x8x24xf32>
    %c0_27 = arith.constant 0 : index
    %c0_28 = arith.constant 0 : index
    %c0_29 = arith.constant 0 : index
    %96 = vector.load %arg3[%c0_27, %c0_28, %c0_29] : memref<2x8x24xf32, #tpu.memory_space<vmem>>, vector<2x8x24xf32>
    tpu.vector_store %arg3[%c0_27, %c0_28, %c0_29], %95 {strides = array<i32>} : memref<2x8x24xf32, #tpu.memory_space<vmem>>, vector<2x8x24xf32>,
    return
  }
}

</mosaic_0001>

<llo_original>
// kernel: tpu_custom_call.1
$region0: #{tpu_custom_call.1}
  #allocation0 [shape = 'u32[]', space=smem, size = 0x4, offset = 0x4, fixed_abs, tag = 'smem constant byte address 0x4 - core index']
  #allocation1 [shape = 'u32[144,128]{1,0:T(1,128)}', space=vmem, size = 0x12000, scoped, tag = 'internal scratch']
  %s0 = inlined_call_operand.vmem [shape: f32[2,24,8], index: 0, kind: input, shape index: {}]
  %s1 = inlined_call_operand.vmem [shape: f32[8,32], index: 1, kind: input, shape index: {}]
  %s2 = inlined_call_operand.vmem [shape: f32[1,32], index: 2, kind: input, shape index: {}]
  %s3 = inlined_call_operand.hbm [shape: f32[2,8,24], index: 3, kind: output, shape index: {}]
  %s4 = sld [smem:[#allocation0]]
  $region22: #{tpu_custom_call.1} parent=0
    _
  %s6 = ssub.s32 1, %s4
  %s7 = scalar_select 0, %s6, %s4
  $region1: #{tpu_custom_call.1} parent=0
    #allocation2 [shape = 'u8[8192]{0}', space=vmem, size = 0x2000, scoped, tag = 'output window, operand 0, single buffered']
    #allocation3 [shape = 's32[1]{0}', space=sflag, size = 0x4, scoped, tag = 'scoped memory for tpu_custom_call.1']
    %8 = vsyncpa [#allocation3], 0
    // Predicated region
    $region2: #{tpu_custom_call.1} parent=1 // pred_check
      _
    $region3: #{tpu_custom_call.1} parent=1 // pred_check_branch
      %10 = sbr.rel (0) target = $region5
    $region4: #{tpu_custom_call.1} parent=1 // pred_region
      _
    $region5: #{tpu_custom_call.1} parent=1 // pred_fallthru
      _
    // Predicated region
    $region6: #{tpu_custom_call.1} parent=1 // pred_check
      _
    $region7: #{tpu_custom_call.1} parent=1 // pred_check_branch
      %12 = sbr.rel (0) target = $region9
    $region8: #{tpu_custom_call.1} parent=1 // pred_region
      _
    $region9: #{tpu_custom_call.1} parent=1 // pred_fallthru
      _
    // Predicated region
    $region10: #{tpu_custom_call.1} parent=1 // pred_check
      _
    $region11: #{tpu_custom_call.1} parent=1 // pred_check_branch
      %14 = sbr.rel (0) target = $region13
    $region12: #{tpu_custom_call.1} parent=1 // pred_region
      _
    $region13: #{tpu_custom_call.1} parent=1 // pred_fallthru
      _
    %v15 = vld [vmem:[%s0] sm:$0xff]
    %v16 = vld [vmem:[%s0 + $0x8] sm:$0xff]
    %v17 = vld [vmem:[%s0 + $0x10] sm:$0xff]
    %v18 = vld [vmem:[%s0 + $0x18] sm:$0xff]
    %v19 = vld [vmem:[%s0 + $0x20] sm:$0xff]
    %v20 = vld [vmem:[%s0 + $0x28] sm:$0xff]
    %v21 = vld [vmem:[%s1] sm:$0xff]
    %v22 = vld [vmem:[%s2] sm:$0x1]
    %v24 = vlaneseq
    %v25 = vshrl.u32 %v24, 7
    %v26 = vsub.s32 0, %v25
    %v27 = vrot.slane %v22, %v26
    %vm29 = vcmask 64512
    %v31 = vsel %vm29, %v15, 0
    %v34 = vsel %vm29, %v16, 0
    %v37 = vsel %vm29, %v17, 0
    %v40 = vsel %vm29, %v18, 0
    %v43 = vsel %vm29, %v19, 0
    %v46 = vsel %vm29, %v20, 0
    %48 = vmatprep.subr.mxu0 0.0
    %49 = vmatpush1.msra.mxu0 %v21
    %50 = vmatprep.subr.mxu0 0.0
    %51 = vmatpush1.msra.mxu0 0.0
    %52 = vmatprep.subr.mxu0 0.0
    %53 = vmatpush1.msra.mxu0 0.0
    %54 = vmatprep.subr.mxu0 0.0
    %55 = vmatpush1.msra.mxu0 0.0
    %56 = vmatprep.subr.mxu0 0.0
    %57 = vmatpush1.msra.mxu0 0.0
    %58 = vmatprep.subr.mxu0 0.0
    %59 = vmatpush1.msra.mxu0 0.0
    %60 = vmatprep.subr.mxu0 0.0
    %61 = vmatpush1.msra.mxu0 0.0
    %62 = vmatprep.subr.mxu0 0.0
    %63 = vmatpush1.msra.mxu0 0.0
    %64 = vmatprep.subr.mxu0 0.0
    %65 = vmatpush1.msra.mxu0 0.0
    %66 = vmatprep.subr.mxu0 0.0
    %67 = vmatpush1.msra.mxu0 0.0
    %68 = vmatprep.subr.mxu0 0.0
    %69 = vmatpush1.msra.mxu0 0.0
    %70 = vmatprep.subr.mxu0 0.0
    %71 = vmatpush1.msra.mxu0 0.0
    %72 = vmatprep.subr.mxu0 0.0
    %73 = vmatpush1.msra.mxu0 0.0
    %74 = vmatprep.subr.mxu0 0.0
    %75 = vmatpush1.msra.mxu0 0.0
    %76 = vmatprep.subr.mxu0 0.0
    %77 = vmatpush1.msra.mxu0 0.0
    %78 = vmatprep.subr.mxu0 0.0
    %79 = vmatpush1.msra.mxu0 0.0
    %80 = vmatprep.subr.mxu0 0.0
    %81 = vmatpush1.msra.mxu0 0.0
    %82 = vmatprep.subr.mxu0 0.0
    %83 = vmatpush1.msra.mxu0 0.0
    %84 = vmatprep.subr.mxu0 0.0
    %85 = vmatpush1.msra.mxu0 0.0
    %86 = vmatprep.subr.mxu0 0.0
    %87 = vmatpush1.msra.mxu0 0.0
    %88 = vmatprep.subr.mxu0 0.0
    %89 = vmatpush1.msra.mxu0 0.0
    %90 = vmatprep.subr.mxu0 0.0
    %91 = vmatpush1.msra.mxu0 0.0
    %92 = vmatprep.subr.mxu0 0.0
    %93 = vmatpush1.msra.mxu0 0.0
    %94 = vmatprep.subr.mxu0 0.0
    %95 = vmatpush1.msra.mxu0 0.0
    %96 = vmatprep.subr.mxu0 0.0
    %97 = vmatpush1.msra.mxu0 0.0
    %98 = vmatprep.subr.mxu0 0.0
    %99 = vmatpush1.msra.mxu0 0.0
    %100 = vmatprep.subr.mxu0 0.0
    %101 = vmatpush1.msra.mxu0 0.0
    %102 = vmatprep.subr.mxu0 0.0
    %103 = vmatpush1.msra.mxu0 0.0
    %104 = vmatprep.subr.mxu0 0.0
    %105 = vmatpush1.msra.mxu0 0.0
    %106 = vmatprep.subr.mxu0 0.0
    %107 = vmatpush1.msra.mxu0 0.0
    %108 = vmatprep.subr.mxu0 0.0
    %109 = vmatpush1.msra.mxu0 0.0
    %110 = vmatprep.subr.mxu0 0.0
    %111 = vmatpush1.msra.mxu0 0.0
    %112 = vmatprep.mubr.f32.mxu0 0.0
    %113 = vmatmul.mubr.f32.gmra.mrb[0].mxu0 %v31
    %v114 = vpop.f32.mrb[0].mxu0
    %v115 = vadd.f32 %v27, %v114
    %v116 = vpop.f32.mrb[0].mxu0
    %117 = vmatprep.mubr.f32.mxu0 0.0
    %118 = vmatmul.mubr.f32.gmra.mrb[0].mxu0 %v34
    %v119 = vpop.f32.mrb[0].mxu0
    %v120 = vadd.f32 %v27, %v119
    %v121 = vpop.f32.mrb[0].mxu0
    %122 = vmatprep.mubr.f32.mxu0 0.0
    %123 = vmatmul.mubr.f32.gmra.mrb[0].mxu0 %v37
    %v124 = vpop.f32.mrb[0].mxu0
    %v125 = vadd.f32 %v27, %v124
    %v126 = vpop.f32.mrb[0].mxu0
    %127 = vmatprep.mubr.f32.mxu0 0.0
    %128 = vmatmul.mubr.f32.gmra.mrb[0].mxu0 %v40
    %v129 = vpop.f32.mrb[0].mxu0
    %v130 = vadd.f32 %v27, %v129
    %v131 = vpop.f32.mrb[0].mxu0
    %132 = vmatprep.mubr.f32.mxu0 0.0
    %133 = vmatmul.mubr.f32.gmra.mrb[0].mxu0 %v43
    %v134 = vpop.f32.mrb[0].mxu0
    %v135 = vadd.f32 %v27, %v134
    %v136 = vpop.f32.mrb[0].mxu0
    %137 = vmatprep.mubr.f32.mxu0 0.0
    %138 = vmatmul.mubr.f32.gmra.mrb[0].mxu0 %v46
    %v139 = vpop.f32.mrb[0].mxu0
    %v140 = vadd.f32 %v27, %v139
    %v141 = vpop.f32.mrb[0].mxu0
    %142 = vdwg.mxu0
    %145 = vrot.lane.b32.xlu0 %v120, 120
    %v146 = vpop.permute.xlu0 %145
    %147 = vrot.lane.b32.xlu0 %v125, 120
    %v148 = vpop.permute.xlu0 %147
    %vm149 = vcmask 31744
    %v151 = vsel %vm149, %v115, 0
    %v153 = vsel %vm149, %v146, 0
    %v155 = vsel %vm149, %v148, 0
    %157 = vmatprep.subr.mxu0 0.0
    %158 = vmatpush1.xpose.msra.mxu0 %v153
    %159 = vmatprep.subr.mxu0 0.0
    %160 = vmatpush1.xpose.msra.mxu0 %v155
    %161 = vmatprep.subr.mxu0 0.0
    %162 = vmatpush1.xpose.msra.mxu0 0.0
    %163 = vmatprep.subr.mxu0 0.0
    %164 = vmatpush1.xpose.msra.mxu0 0.0
    %165 = vmatprep.subr.mxu0 0.0
    %166 = vmatpush1.xpose.msra.mxu0 0.0
    %167 = vmatprep.subr.mxu0 0.0
    %168 = vmatpush1.xpose.msra.mxu0 0.0
    %169 = vmatprep.subr.mxu0 0.0
    %170 = vmatpush1.xpose.msra.mxu0 0.0
    %171 = vmatprep.subr.mxu0 0.0
    %172 = vmatpush1.xpose.msra.mxu0 0.0
    %173 = vmatprep.subr.mxu0 0.0
    %174 = vmatpush1.xpose.msra.mxu0 0.0
    %175 = vmatprep.subr.mxu0 0.0
    %176 = vmatpush1.xpose.msra.mxu0 0.0
    %177 = vmatprep.subr.mxu0 0.0
    %178 = vmatpush1.xpose.msra.mxu0 0.0
    %179 = vmatprep.subr.mxu0 0.0
    %180 = vmatpush1.xpose.msra.mxu0 0.0
    %181 = vmatprep.subr.mxu0 0.0
    %182 = vmatpush1.xpose.msra.mxu0 0.0
    %183 = vmatprep.subr.mxu0 0.0
    %184 = vmatpush1.xpose.msra.mxu0 0.0
    %185 = vmatprep.subr.mxu0 0.0
    %186 = vmatpush1.xpose.msra.mxu0 0.0
    %187 = vmatprep.subr.mxu0 0.0
    %188 = vmatpush1.xpose.msra.mxu0 0.0
    %189 = vmatprep.subr.mxu0 0.0
    %190 = vmatpush1.xpose.msra.mxu0 0.0
    %191 = vmatprep.subr.mxu0 0.0
    %192 = vmatpush1.xpose.msra.mxu0 0.0
    %193 = vmatprep.subr.mxu0 0.0
    %194 = vmatpush1.xpose.msra.mxu0 0.0
    %195 = vmatprep.subr.mxu0 0.0
    %196 = vmatpush1.xpose.msra.mxu0 0.0
    %197 = vmatprep.subr.mxu0 0.0
    %198 = vmatpush1.xpose.msra.mxu0 0.0
    %199 = vmatprep.subr.mxu0 0.0
    %200 = vmatpush1.xpose.msra.mxu0 0.0
    %201 = vmatprep.subr.mxu0 0.0
    %202 = vmatpush1.xpose.msra.mxu0 0.0
    %203 = vmatprep.subr.mxu0 0.0
    %204 = vmatpush1.xpose.msra.mxu0 0.0
    %205 = vmatprep.subr.mxu0 0.0
    %206 = vmatpush1.xpose.msra.mxu0 0.0
    %207 = vmatprep.subr.mxu0 0.0
    %208 = vmatpush1.xpose.msra.mxu0 0.0
    %209 = vmatprep.subr.mxu0 0.0
    %210 = vmatpush1.xpose.msra.mxu0 0.0
    %211 = vmatprep.subr.mxu0 0.0
    %212 = vmatpush1.xpose.msra.mxu0 0.0
    %213 = vmatprep.subr.mxu0 0.0
    %214 = vmatpush1.xpose.msra.mxu0 0.0
    %215 = vmatprep.subr.mxu0 0.0
    %216 = vmatpush1.xpose.msra.mxu0 0.0
    %217 = vmatprep.subr.mxu0 0.0
    %218 = vmatpush1.xpose.msra.mxu0 0.0
    %219 = vmatprep.subr.mxu0 0.0
    %220 = vmatpush1.xpose.msra.mxu0 0.0
    %221 = vmatprep.mubr.f32.mxu0 0.0
    %222 = vmatmul.mubr.f32.gmra.mrb[0].mxu0 %v151
    %v223 = vpop.f32.mrb[0].mxu0
    %v224 = vadd.f32 0.0, %v223
    %v225 = vpop.f32.mrb[0].mxu0
    %226 = vdwg.mxu0
    %vm227 = vcmask 130048
    %v228 = vsel %vm227, %v224, -inf
    %229 = vmax.xlane.f32.xlu0 %v228
    %v230 = vpop.xlane.xlu0 %229
    %v231 = vsub.f32 %v224, %v230
    %v232 = vmul.f32 %v231, 1.442695
    %v233 = vpow.pop %v232
    %v234 = vsel %vm227, %v233, 0.0
    %235 = vadd.xlane.f32.xlu0 %v234
    %v236 = vpop.xlane.xlu0 %235
    %v237 = vrcp.pop %v236
    %v238 = vmul.f32 %v233, %v237
    %v239 = vadd.f32 %v238, 0.0
    %240 = vrot.lane.b32.xlu0 %v120, 112
    %v241 = vpop.permute.xlu0 %240
    %242 = vrot.lane.b32.xlu0 %v125, 112
    %v243 = vpop.permute.xlu0 %242
    %v247 = vsel %vm227, %v238, 0
    %249 = vmatprep.subr.mxu0 0.0
    %250 = vmatpush1.msra.mxu0 %v241
    %251 = vmatprep.subr.mxu0 0.0
    %252 = vmatpush1.msra.mxu0 %v243
    %253 = vmatprep.subr.mxu0 0.0
    %254 = vmatpush1.msra.mxu0 0.0
    %255 = vmatprep.subr.mxu0 0.0
    %256 = vmatpush1.msra.mxu0 0.0
    %257 = vmatprep.subr.mxu0 0.0
    %258 = vmatpush1.msra.mxu0 0.0
    %259 = vmatprep.subr.mxu0 0.0
    %260 = vmatpush1.msra.mxu0 0.0
    %261 = vmatprep.subr.mxu0 0.0
    %262 = vmatpush1.msra.mxu0 0.0
    %263 = vmatprep.subr.mxu0 0.0
    %264 = vmatpush1.msra.mxu0 0.0
    %265 = vmatprep.subr.mxu0 0.0
    %266 = vmatpush1.msra.mxu0 0.0
    %267 = vmatprep.subr.mxu0 0.0
    %268 = vmatpush1.msra.mxu0 0.0
    %269 = vmatprep.subr.mxu0 0.0
    %270 = vmatpush1.msra.mxu0 0.0
    %271 = vmatprep.subr.mxu0 0.0
    %272 = vmatpush1.msra.mxu0 0.0
    %273 = vmatprep.subr.mxu0 0.0
    %274 = vmatpush1.msra.mxu0 0.0
    %275 = vmatprep.subr.mxu0 0.0
    %276 = vmatpush1.msra.mxu0 0.0
    %277 = vmatprep.subr.mxu0 0.0
    %278 = vmatpush1.msra.mxu0 0.0
    %279 = vmatprep.subr.mxu0 0.0
    %280 = vmatpush1.msra.mxu0 0.0
    %281 = vmatprep.subr.mxu0 0.0
    %282 = vmatpush1.msra.mxu0 0.0
    %283 = vmatprep.subr.mxu0 0.0
    %284 = vmatpush1.msra.mxu0 0.0
    %285 = vmatprep.subr.mxu0 0.0
    %286 = vmatpush1.msra.mxu0 0.0
    %287 = vmatprep.subr.mxu0 0.0
    %288 = vmatpush1.msra.mxu0 0.0
    %289 = vmatprep.subr.mxu0 0.0
    %290 = vmatpush1.msra.mxu0 0.0
    %291 = vmatprep.subr.mxu0 0.0
    %292 = vmatpush1.msra.mxu0 0.0
    %293 = vmatprep.subr.mxu0 0.0
    %294 = vmatpush1.msra.mxu0 0.0
    %295 = vmatprep.subr.mxu0 0.0
    %296 = vmatpush1.msra.mxu0 0.0
    %297 = vmatprep.subr.mxu0 0.0
    %298 = vmatpush1.msra.mxu0 0.0
    %299 = vmatprep.subr.mxu0 0.0
    %300 = vmatpush1.msra.mxu0 0.0
    %301 = vmatprep.subr.mxu0 0.0
    %302 = vmatpush1.msra.mxu0 0.0
    %303 = vmatprep.subr.mxu0 0.0
    %304 = vmatpush1.msra.mxu0 0.0
    %305 = vmatprep.subr.mxu0 0.0
    %306 = vmatpush1.msra.mxu0 0.0
    %307 = vmatprep.subr.mxu0 0.0
    %308 = vmatpush1.msra.mxu0 0.0
    %309 = vmatprep.subr.mxu0 0.0
    %310 = vmatpush1.msra.mxu0 0.0
    %311 = vmatprep.subr.mxu0 0.0
    %312 = vmatpush1.msra.mxu0 0.0
    %313 = vmatprep.mubr.f32.mxu0 0.0
    %314 = vmatmul.mubr.f32.gmra.mrb[0].mxu0 %v247
    %v315 = vpop.f32.mrb[0].mxu0
    %v316 = vadd.f32 0.0, %v315
    %v317 = vpop.f32.mrb[0].mxu0
    %318 = vdwg.mxu0
    %319 = vrot.lane.b32.xlu0 %v115, 124
    %v320 = vpop.permute.xlu0 %319
    %321 = vrot.lane.b32.xlu0 %v120, 116
    %v322 = vpop.permute.xlu0 %321
    %323 = vrot.lane.b32.xlu0 %v125, 116
    %v324 = vpop.permute.xlu0 %323
    %v325 = vsel %vm149, %v320, 0
    %v327 = vsel %vm149, %v322, 0
    %v329 = vsel %vm149, %v324, 0
    %331 = vmatprep.subr.mxu0 0.0
    %332 = vmatpush1.xpose.msra.mxu0 %v327
    %333 = vmatprep.subr.mxu0 0.0
    %334 = vmatpush1.xpose.msra.mxu0 %v329
    %335 = vmatprep.subr.mxu0 0.0
    %336 = vmatpush1.xpose.msra.mxu0 0.0
    %337 = vmatprep.subr.mxu0 0.0
    %338 = vmatpush1.xpose.msra.mxu0 0.0
    %339 = vmatprep.subr.mxu0 0.0
    %340 = vmatpush1.xpose.msra.mxu0 0.0
    %341 = vmatprep.subr.mxu0 0.0
    %342 = vmatpush1.xpose.msra.mxu0 0.0
    %343 = vmatprep.subr.mxu0 0.0
    %344 = vmatpush1.xpose.msra.mxu0 0.0
    %345 = vmatprep.subr.mxu0 0.0
    %346 = vmatpush1.xpose.msra.mxu0 0.0
    %347 = vmatprep.subr.mxu0 0.0
    %348 = vmatpush1.xpose.msra.mxu0 0.0
    %349 = vmatprep.subr.mxu0 0.0
    %350 = vmatpush1.xpose.msra.mxu0 0.0
    %351 = vmatprep.subr.mxu0 0.0
    %352 = vmatpush1.xpose.msra.mxu0 0.0
    %353 = vmatprep.subr.mxu0 0.0
    %354 = vmatpush1.xpose.msra.mxu0 0.0
    %355 = vmatprep.subr.mxu0 0.0
    %356 = vmatpush1.xpose.msra.mxu0 0.0
    %357 = vmatprep.subr.mxu0 0.0
    %358 = vmatpush1.xpose.msra.mxu0 0.0
    %359 = vmatprep.subr.mxu0 0.0
    %360 = vmatpush1.xpose.msra.mxu0 0.0
    %361 = vmatprep.subr.mxu0 0.0
    %362 = vmatpush1.xpose.msra.mxu0 0.0
    %363 = vmatprep.subr.mxu0 0.0
    %364 = vmatpush1.xpose.msra.mxu0 0.0
    %365 = vmatprep.subr.mxu0 0.0
    %366 = vmatpush1.xpose.msra.mxu0 0.0
    %367 = vmatprep.subr.mxu0 0.0
    %368 = vmatpush1.xpose.msra.mxu0 0.0
    %369 = vmatprep.subr.mxu0 0.0
    %370 = vmatpush1.xpose.msra.mxu0 0.0
    %371 = vmatprep.subr.mxu0 0.0
    %372 = vmatpush1.xpose.msra.mxu0 0.0
    %373 = vmatprep.subr.mxu0 0.0
    %374 = vmatpush1.xpose.msra.mxu0 0.0
    %375 = vmatprep.subr.mxu0 0.0
    %376 = vmatpush1.xpose.msra.mxu0 0.0
    %377 = vmatprep.subr.mxu0 0.0
    %378 = vmatpush1.xpose.msra.mxu0 0.0
    %379 = vmatprep.subr.mxu0 0.0
    %380 = vmatpush1.xpose.msra.mxu0 0.0
    %381 = vmatprep.subr.mxu0 0.0
    %382 = vmatpush1.xpose.msra.mxu0 0.0
    %383 = vmatprep.subr.mxu0 0.0
    %384 = vmatpush1.xpose.msra.mxu0 0.0
    %385 = vmatprep.subr.mxu0 0.0
    %386 = vmatpush1.xpose.msra.mxu0 0.0
    %387 = vmatprep.subr.mxu0 0.0
    %388 = vmatpush1.xpose.msra.mxu0 0.0
    %389 = vmatprep.subr.mxu0 0.0
    %390 = vmatpush1.xpose.msra.mxu0 0.0
    %391 = vmatprep.subr.mxu0 0.0
    %392 = vmatpush1.xpose.msra.mxu0 0.0
    %393 = vmatprep.subr.mxu0 0.0
    %394 = vmatpush1.xpose.msra.mxu0 0.0
    %395 = vmatprep.mubr.f32.mxu0 0.0
    %396 = vmatmul.mubr.f32.gmra.mrb[0].mxu0 %v325
    %v397 = vpop.f32.mrb[0].mxu0
    %v398 = vadd.f32 0.0, %v397
    %v399 = vpop.f32.mrb[0].mxu0
    %400 = vdwg.mxu0
    %v401 = vsel %vm227, %v398, -inf
    %402 = vmax.xlane.f32.xlu0 %v401
    %v403 = vpop.xlane.xlu0 %402
    %v404 = vsub.f32 %v398, %v403
    %v405 = vmul.f32 %v404, 1.442695
    %v406 = vpow.pop %v405
    %v407 = vsel %vm227, %v406, 0.0
    %408 = vadd.xlane.f32.xlu0 %v407
    %v409 = vpop.xlane.xlu0 %408
    %v410 = vrcp.pop %v409
    %v411 = vmul.f32 %v406, %v410
    %v412 = vadd.f32 %v239, %v411
    %413 = vrot.lane.b32.xlu0 %v120, 108
    %v414 = vpop.permute.xlu0 %413
    %415 = vrot.lane.b32.xlu0 %v125, 108
    %v416 = vpop.permute.xlu0 %415
    %v420 = vsel %vm227, %v411, 0
    %422 = vmatprep.subr.mxu0 0.0
    %423 = vmatpush1.msra.mxu0 %v414
    %424 = vmatprep.subr.mxu0 0.0
    %425 = vmatpush1.msra.mxu0 %v416
    %426 = vmatprep.subr.mxu0 0.0
    %427 = vmatpush1.msra.mxu0 0.0
    %428 = vmatprep.subr.mxu0 0.0
    %429 = vmatpush1.msra.mxu0 0.0
    %430 = vmatprep.subr.mxu0 0.0
    %431 = vmatpush1.msra.mxu0 0.0
    %432 = vmatprep.subr.mxu0 0.0
    %433 = vmatpush1.msra.mxu0 0.0
    %434 = vmatprep.subr.mxu0 0.0
    %435 = vmatpush1.msra.mxu0 0.0
    %436 = vmatprep.subr.mxu0 0.0
    %437 = vmatpush1.msra.mxu0 0.0
    %438 = vmatprep.subr.mxu0 0.0
    %439 = vmatpush1.msra.mxu0 0.0
    %440 = vmatprep.subr.mxu0 0.0
    %441 = vmatpush1.msra.mxu0 0.0
    %442 = vmatprep.subr.mxu0 0.0
    %443 = vmatpush1.msra.mxu0 0.0
    %444 = vmatprep.subr.mxu0 0.0
    %445 = vmatpush1.msra.mxu0 0.0
    %446 = vmatprep.subr.mxu0 0.0
    %447 = vmatpush1.msra.mxu0 0.0
    %448 = vmatprep.subr.mxu0 0.0
    %449 = vmatpush1.msra.mxu0 0.0
    %450 = vmatprep.subr.mxu0 0.0
    %451 = vmatpush1.msra.mxu0 0.0
    %452 = vmatprep.subr.mxu0 0.0
    %453 = vmatpush1.msra.mxu0 0.0
    %454 = vmatprep.subr.mxu0 0.0
    %455 = vmatpush1.msra.mxu0 0.0
    %456 = vmatprep.subr.mxu0 0.0
    %457 = vmatpush1.msra.mxu0 0.0
    %458 = vmatprep.subr.mxu0 0.0
    %459 = vmatpush1.msra.mxu0 0.0
    %460 = vmatprep.subr.mxu0 0.0
    %461 = vmatpush1.msra.mxu0 0.0
    %462 = vmatprep.subr.mxu0 0.0
    %463 = vmatpush1.msra.mxu0 0.0
    %464 = vmatprep.subr.mxu0 0.0
    %465 = vmatpush1.msra.mxu0 0.0
    %466 = vmatprep.subr.mxu0 0.0
    %467 = vmatpush1.msra.mxu0 0.0
    %468 = vmatprep.subr.mxu0 0.0
    %469 = vmatpush1.msra.mxu0 0.0
    %470 = vmatprep.subr.mxu0 0.0
    %471 = vmatpush1.msra.mxu0 0.0
    %472 = vmatprep.subr.mxu0 0.0
    %473 = vmatpush1.msra.mxu0 0.0
    %474 = vmatprep.subr.mxu0 0.0
    %475 = vmatpush1.msra.mxu0 0.0
    %476 = vmatprep.subr.mxu0 0.0
    %477 = vmatpush1.msra.mxu0 0.0
    %478 = vmatprep.subr.mxu0 0.0
    %479 = vmatpush1.msra.mxu0 0.0
    %480 = vmatprep.subr.mxu0 0.0
    %481 = vmatpush1.msra.mxu0 0.0
    %482 = vmatprep.subr.mxu0 0.0
    %483 = vmatpush1.msra.mxu0 0.0
    %484 = vmatprep.subr.mxu0 0.0
    %485 = vmatpush1.msra.mxu0 0.0
    %486 = vmatprep.mubr.f32.mxu0 0.0
    %487 = vmatmul.mubr.f32.gmra.mrb[0].mxu0 %v420
    %v488 = vpop.f32.mrb[0].mxu0
    %v489 = vadd.f32 0.0, %v488
    %v490 = vpop.f32.mrb[0].mxu0
    %491 = vdwg.mxu0
    %493 = vrot.lane.b32.xlu0 %v489, 4
    %v494 = vpop.permute.xlu0 %493
    %v496 = vsel %vm149, %v316, %v494
    %v497 = vmul.f32 %v412, 0.5
    %500 = vrot.lane.b32.xlu0 %v135, 120
    %v501 = vpop.permute.xlu0 %500
    %502 = vrot.lane.b32.xlu0 %v140, 120
    %v503 = vpop.permute.xlu0 %502
    %v505 = vsel %vm149, %v130, 0
    %v507 = vsel %vm149, %v501, 0
    %v509 = vsel %vm149, %v503, 0
    %511 = vmatprep.subr.mxu0 0.0
    %512 = vmatpush1.xpose.msra.mxu0 %v507
    %513 = vmatprep.subr.mxu0 0.0
    %514 = vmatpush1.xpose.msra.mxu0 %v509
    %515 = vmatprep.subr.mxu0 0.0
    %516 = vmatpush1.xpose.msra.mxu0 0.0
    %517 = vmatprep.subr.mxu0 0.0
    %518 = vmatpush1.xpose.msra.mxu0 0.0
    %519 = vmatprep.subr.mxu0 0.0
    %520 = vmatpush1.xpose.msra.mxu0 0.0
    %521 = vmatprep.subr.mxu0 0.0
    %522 = vmatpush1.xpose.msra.mxu0 0.0
    %523 = vmatprep.subr.mxu0 0.0
    %524 = vmatpush1.xpose.msra.mxu0 0.0
    %525 = vmatprep.subr.mxu0 0.0
    %526 = vmatpush1.xpose.msra.mxu0 0.0
    %527 = vmatprep.subr.mxu0 0.0
    %528 = vmatpush1.xpose.msra.mxu0 0.0
    %529 = vmatprep.subr.mxu0 0.0
    %530 = vmatpush1.xpose.msra.mxu0 0.0
    %531 = vmatprep.subr.mxu0 0.0
    %532 = vmatpush1.xpose.msra.mxu0 0.0
    %533 = vmatprep.subr.mxu0 0.0
    %534 = vmatpush1.xpose.msra.mxu0 0.0
    %535 = vmatprep.subr.mxu0 0.0
    %536 = vmatpush1.xpose.msra.mxu0 0.0
    %537 = vmatprep.subr.mxu0 0.0
    %538 = vmatpush1.xpose.msra.mxu0 0.0
    %539 = vmatprep.subr.mxu0 0.0
    %540 = vmatpush1.xpose.msra.mxu0 0.0
    %541 = vmatprep.subr.mxu0 0.0
    %542 = vmatpush1.xpose.msra.mxu0 0.0
    %543 = vmatprep.subr.mxu0 0.0
    %544 = vmatpush1.xpose.msra.mxu0 0.0
    %545 = vmatprep.subr.mxu0 0.0
    %546 = vmatpush1.xpose.msra.mxu0 0.0
    %547 = vmatprep.subr.mxu0 0.0
    %548 = vmatpush1.xpose.msra.mxu0 0.0
    %549 = vmatprep.subr.mxu0 0.0
    %550 = vmatpush1.xpose.msra.mxu0 0.0
    %551 = vmatprep.subr.mxu0 0.0
    %552 = vmatpush1.xpose.msra.mxu0 0.0
    %553 = vmatprep.subr.mxu0 0.0
    %554 = vmatpush1.xpose.msra.mxu0 0.0
    %555 = vmatprep.subr.mxu0 0.0
    %556 = vmatpush1.xpose.msra.mxu0 0.0
    %557 = vmatprep.subr.mxu0 0.0
    %558 = vmatpush1.xpose.msra.mxu0 0.0
    %559 = vmatprep.subr.mxu0 0.0
    %560 = vmatpush1.xpose.msra.mxu0 0.0
    %561 = vmatprep.subr.mxu0 0.0
    %562 = vmatpush1.xpose.msra.mxu0 0.0
    %563 = vmatprep.subr.mxu0 0.0
    %564 = vmatpush1.xpose.msra.mxu0 0.0
    %565 = vmatprep.subr.mxu0 0.0
    %566 = vmatpush1.xpose.msra.mxu0 0.0
    %567 = vmatprep.subr.mxu0 0.0
    %568 = vmatpush1.xpose.msra.mxu0 0.0
    %569 = vmatprep.subr.mxu0 0.0
    %570 = vmatpush1.xpose.msra.mxu0 0.0
    %571 = vmatprep.subr.mxu0 0.0
    %572 = vmatpush1.xpose.msra.mxu0 0.0
    %573 = vmatprep.subr.mxu0 0.0
    %574 = vmatpush1.xpose.msra.mxu0 0.0
    %575 = vmatprep.mubr.f32.mxu0 0.0
    %576 = vmatmul.mubr.f32.gmra.mrb[0].mxu0 %v505
    %v577 = vpop.f32.mrb[0].mxu0
    %v578 = vadd.f32 0.0, %v577
    %v579 = vpop.f32.mrb[0].mxu0
    %580 = vdwg.mxu0
    %v581 = vsel %vm227, %v578, -inf
    %582 = vmax.xlane.f32.xlu0 %v581
    %v583 = vpop.xlane.xlu0 %582
    %v584 = vsub.f32 %v578, %v583
    %v585 = vmul.f32 %v584, 1.442695
    %v586 = vpow.pop %v585
    %v587 = vsel %vm227, %v586, 0.0
    %588 = vadd.xlane.f32.xlu0 %v587
    %v589 = vpop.xlane.xlu0 %588
    %v590 = vrcp.pop %v589
    %v591 = vmul.f32 %v586, %v590
    %v592 = vadd.f32 %v591, 0.0
    %593 = vrot.lane.b32.xlu0 %v135, 112
    %v594 = vpop.permute.xlu0 %593
    %595 = vrot.lane.b32.xlu0 %v140, 112
    %v596 = vpop.permute.xlu0 %595
    %v600 = vsel %vm227, %v591, 0
    %602 = vmatprep.subr.mxu0 0.0
    %603 = vmatpush1.msra.mxu0 %v594
    %604 = vmatprep.subr.mxu0 0.0
    %605 = vmatpush1.msra.mxu0 %v596
    %606 = vmatprep.subr.mxu0 0.0
    %607 = vmatpush1.msra.mxu0 0.0
    %608 = vmatprep.subr.mxu0 0.0
    %609 = vmatpush1.msra.mxu0 0.0
    %610 = vmatprep.subr.mxu0 0.0
    %611 = vmatpush1.msra.mxu0 0.0
    %612 = vmatprep.subr.mxu0 0.0
    %613 = vmatpush1.msra.mxu0 0.0
    %614 = vmatprep.subr.mxu0 0.0
    %615 = vmatpush1.msra.mxu0 0.0
    %616 = vmatprep.subr.mxu0 0.0
    %617 = vmatpush1.msra.mxu0 0.0
    %618 = vmatprep.subr.mxu0 0.0
    %619 = vmatpush1.msra.mxu0 0.0
    %620 = vmatprep.subr.mxu0 0.0
    %621 = vmatpush1.msra.mxu0 0.0
    %622 = vmatprep.subr.mxu0 0.0
    %623 = vmatpush1.msra.mxu0 0.0
    %624 = vmatprep.subr.mxu0 0.0
    %625 = vmatpush1.msra.mxu0 0.0
    %626 = vmatprep.subr.mxu0 0.0
    %627 = vmatpush1.msra.mxu0 0.0
    %628 = vmatprep.subr.mxu0 0.0
    %629 = vmatpush1.msra.mxu0 0.0
    %630 = vmatprep.subr.mxu0 0.0
    %631 = vmatpush1.msra.mxu0 0.0
    %632 = vmatprep.subr.mxu0 0.0
    %633 = vmatpush1.msra.mxu0 0.0
    %634 = vmatprep.subr.mxu0 0.0
    %635 = vmatpush1.msra.mxu0 0.0
    %636 = vmatprep.subr.mxu0 0.0
    %637 = vmatpush1.msra.mxu0 0.0
    %638 = vmatprep.subr.mxu0 0.0
    %639 = vmatpush1.msra.mxu0 0.0
    %640 = vmatprep.subr.mxu0 0.0
    %641 = vmatpush1.msra.mxu0 0.0
    %642 = vmatprep.subr.mxu0 0.0
    %643 = vmatpush1.msra.mxu0 0.0
    %644 = vmatprep.subr.mxu0 0.0
    %645 = vmatpush1.msra.mxu0 0.0
    %646 = vmatprep.subr.mxu0 0.0
    %647 = vmatpush1.msra.mxu0 0.0
    %648 = vmatprep.subr.mxu0 0.0
    %649 = vmatpush1.msra.mxu0 0.0
    %650 = vmatprep.subr.mxu0 0.0
    %651 = vmatpush1.msra.mxu0 0.0
    %652 = vmatprep.subr.mxu0 0.0
    %653 = vmatpush1.msra.mxu0 0.0
    %654 = vmatprep.subr.mxu0 0.0
    %655 = vmatpush1.msra.mxu0 0.0
    %656 = vmatprep.subr.mxu0 0.0
    %657 = vmatpush1.msra.mxu0 0.0
    %658 = vmatprep.subr.mxu0 0.0
    %659 = vmatpush1.msra.mxu0 0.0
    %660 = vmatprep.subr.mxu0 0.0
    %661 = vmatpush1.msra.mxu0 0.0
    %662 = vmatprep.subr.mxu0 0.0
    %663 = vmatpush1.msra.mxu0 0.0
    %664 = vmatprep.subr.mxu0 0.0
    %665 = vmatpush1.msra.mxu0 0.0
    %666 = vmatprep.mubr.f32.mxu0 0.0
    %667 = vmatmul.mubr.f32.gmra.mrb[0].mxu0 %v600
    %v668 = vpop.f32.mrb[0].mxu0
    %v669 = vadd.f32 0.0, %v668
    %v670 = vpop.f32.mrb[0].mxu0
    %671 = vdwg.mxu0
    %672 = vrot.lane.b32.xlu0 %v130, 124
    %v673 = vpop.permute.xlu0 %672
    %674 = vrot.lane.b32.xlu0 %v135, 116
    %v675 = vpop.permute.xlu0 %674
    %676 = vrot.lane.b32.xlu0 %v140, 116
    %v677 = vpop.permute.xlu0 %676
    %v678 = vsel %vm149, %v673, 0
    %v680 = vsel %vm149, %v675, 0
    %v682 = vsel %vm149, %v677, 0
    %684 = vmatprep.subr.mxu0 0.0
    %685 = vmatpush1.xpose.msra.mxu0 %v680
    %686 = vmatprep.subr.mxu0 0.0
    %687 = vmatpush1.xpose.msra.mxu0 %v682
    %688 = vmatprep.subr.mxu0 0.0
    %689 = vmatpush1.xpose.msra.mxu0 0.0
    %690 = vmatprep.subr.mxu0 0.0
    %691 = vmatpush1.xpose.msra.mxu0 0.0
    %692 = vmatprep.subr.mxu0 0.0
    %693 = vmatpush1.xpose.msra.mxu0 0.0
    %694 = vmatprep.subr.mxu0 0.0
    %695 = vmatpush1.xpose.msra.mxu0 0.0
    %696 = vmatprep.subr.mxu0 0.0
    %697 = vmatpush1.xpose.msra.mxu0 0.0
    %698 = vmatprep.subr.mxu0 0.0
    %699 = vmatpush1.xpose.msra.mxu0 0.0
    %700 = vmatprep.subr.mxu0 0.0
    %701 = vmatpush1.xpose.msra.mxu0 0.0
    %702 = vmatprep.subr.mxu0 0.0
    %703 = vmatpush1.xpose.msra.mxu0 0.0
    %704 = vmatprep.subr.mxu0 0.0
    %705 = vmatpush1.xpose.msra.mxu0 0.0
    %706 = vmatprep.subr.mxu0 0.0
    %707 = vmatpush1.xpose.msra.mxu0 0.0
    %708 = vmatprep.subr.mxu0 0.0
    %709 = vmatpush1.xpose.msra.mxu0 0.0
    %710 = vmatprep.subr.mxu0 0.0
    %711 = vmatpush1.xpose.msra.mxu0 0.0
    %712 = vmatprep.subr.mxu0 0.0
    %713 = vmatpush1.xpose.msra.mxu0 0.0
    %714 = vmatprep.subr.mxu0 0.0
    %715 = vmatpush1.xpose.msra.mxu0 0.0
    %716 = vmatprep.subr.mxu0 0.0
    %717 = vmatpush1.xpose.msra.mxu0 0.0
    %718 = vmatprep.subr.mxu0 0.0
    %719 = vmatpush1.xpose.msra.mxu0 0.0
    %720 = vmatprep.subr.mxu0 0.0
    %721 = vmatpush1.xpose.msra.mxu0 0.0
    %722 = vmatprep.subr.mxu0 0.0
    %723 = vmatpush1.xpose.msra.mxu0 0.0
    %724 = vmatprep.subr.mxu0 0.0
    %725 = vmatpush1.xpose.msra.mxu0 0.0
    %726 = vmatprep.subr.mxu0 0.0
    %727 = vmatpush1.xpose.msra.mxu0 0.0
    %728 = vmatprep.subr.mxu0 0.0
    %729 = vmatpush1.xpose.msra.mxu0 0.0
    %730 = vmatprep.subr.mxu0 0.0
    %731 = vmatpush1.xpose.msra.mxu0 0.0
    %732 = vmatprep.subr.mxu0 0.0
    %733 = vmatpush1.xpose.msra.mxu0 0.0
    %734 = vmatprep.subr.mxu0 0.0
    %735 = vmatpush1.xpose.msra.mxu0 0.0
    %736 = vmatprep.subr.mxu0 0.0
    %737 = vmatpush1.xpose.msra.mxu0 0.0
    %738 = vmatprep.subr.mxu0 0.0
    %739 = vmatpush1.xpose.msra.mxu0 0.0
    %740 = vmatprep.subr.mxu0 0.0
    %741 = vmatpush1.xpose.msra.mxu0 0.0
    %742 = vmatprep.subr.mxu0 0.0
    %743 = vmatpush1.xpose.msra.mxu0 0.0
    %744 = vmatprep.subr.mxu0 0.0
    %745 = vmatpush1.xpose.msra.mxu0 0.0
    %746 = vmatprep.subr.mxu0 0.0
    %747 = vmatpush1.xpose.msra.mxu0 0.0
    %748 = vmatprep.mubr.f32.mxu0 0.0
    %749 = vmatmul.mubr.f32.gmra.mrb[0].mxu0 %v678
    %v750 = vpop.f32.mrb[0].mxu0
    %v751 = vadd.f32 0.0, %v750
    %v752 = vpop.f32.mrb[0].mxu0
    %753 = vdwg.mxu0
    %v754 = vsel %vm227, %v751, -inf
    %755 = vmax.xlane.f32.xlu0 %v754
    %v756 = vpop.xlane.xlu0 %755
    %v757 = vsub.f32 %v751, %v756
    %v758 = vmul.f32 %v757, 1.442695
    %v759 = vpow.pop %v758
    %v760 = vsel %vm227, %v759, 0.0
    %761 = vadd.xlane.f32.xlu0 %v760
    %v762 = vpop.xlane.xlu0 %761
    %v763 = vrcp.pop %v762
    %v764 = vmul.f32 %v759, %v763
    %v765 = vadd.f32 %v592, %v764
    %766 = vrot.lane.b32.xlu0 %v135, 108
    %v767 = vpop.permute.xlu0 %766
    %768 = vrot.lane.b32.xlu0 %v140, 108
    %v769 = vpop.permute.xlu0 %768
    %v773 = vsel %vm227, %v764, 0
    %775 = vmatprep.subr.mxu0 0.0
    %776 = vmatpush1.msra.mxu0 %v767
    %777 = vmatprep.subr.mxu0 0.0
    %778 = vmatpush1.msra.mxu0 %v769
    %779 = vmatprep.subr.mxu0 0.0
    %780 = vmatpush1.msra.mxu0 0.0
    %781 = vmatprep.subr.mxu0 0.0
    %782 = vmatpush1.msra.mxu0 0.0
    %783 = vmatprep.subr.mxu0 0.0
    %784 = vmatpush1.msra.mxu0 0.0
    %785 = vmatprep.subr.mxu0 0.0
    %786 = vmatpush1.msra.mxu0 0.0
    %787 = vmatprep.subr.mxu0 0.0
    %788 = vmatpush1.msra.mxu0 0.0
    %789 = vmatprep.subr.mxu0 0.0
    %790 = vmatpush1.msra.mxu0 0.0
    %791 = vmatprep.subr.mxu0 0.0
    %792 = vmatpush1.msra.mxu0 0.0
    %793 = vmatprep.subr.mxu0 0.0
    %794 = vmatpush1.msra.mxu0 0.0
    %795 = vmatprep.subr.mxu0 0.0
    %796 = vmatpush1.msra.mxu0 0.0
    %797 = vmatprep.subr.mxu0 0.0
    %798 = vmatpush1.msra.mxu0 0.0
    %799 = vmatprep.subr.mxu0 0.0
    %800 = vmatpush1.msra.mxu0 0.0
    %801 = vmatprep.subr.mxu0 0.0
    %802 = vmatpush1.msra.mxu0 0.0
    %803 = vmatprep.subr.mxu0 0.0
    %804 = vmatpush1.msra.mxu0 0.0
    %805 = vmatprep.subr.mxu0 0.0
    %806 = vmatpush1.msra.mxu0 0.0
    %807 = vmatprep.subr.mxu0 0.0
    %808 = vmatpush1.msra.mxu0 0.0
    %809 = vmatprep.subr.mxu0 0.0
    %810 = vmatpush1.msra.mxu0 0.0
    %811 = vmatprep.subr.mxu0 0.0
    %812 = vmatpush1.msra.mxu0 0.0
    %813 = vmatprep.subr.mxu0 0.0
    %814 = vmatpush1.msra.mxu0 0.0
    %815 = vmatprep.subr.mxu0 0.0
    %816 = vmatpush1.msra.mxu0 0.0
    %817 = vmatprep.subr.mxu0 0.0
    %818 = vmatpush1.msra.mxu0 0.0
    %819 = vmatprep.subr.mxu0 0.0
    %820 = vmatpush1.msra.mxu0 0.0
    %821 = vmatprep.subr.mxu0 0.0
    %822 = vmatpush1.msra.mxu0 0.0
    %823 = vmatprep.subr.mxu0 0.0
    %824 = vmatpush1.msra.mxu0 0.0
    %825 = vmatprep.subr.mxu0 0.0
    %826 = vmatpush1.msra.mxu0 0.0
    %827 = vmatprep.subr.mxu0 0.0
    %828 = vmatpush1.msra.mxu0 0.0
    %829 = vmatprep.subr.mxu0 0.0
    %830 = vmatpush1.msra.mxu0 0.0
    %831 = vmatprep.subr.mxu0 0.0
    %832 = vmatpush1.msra.mxu0 0.0
    %833 = vmatprep.subr.mxu0 0.0
    %834 = vmatpush1.msra.mxu0 0.0
    %835 = vmatprep.subr.mxu0 0.0
    %836 = vmatpush1.msra.mxu0 0.0
    %837 = vmatprep.subr.mxu0 0.0
    %838 = vmatpush1.msra.mxu0 0.0
    %839 = vmatprep.mubr.f32.mxu0 0.0
    %840 = vmatmul.mubr.f32.gmra.mrb[0].mxu0 %v773
    %v841 = vpop.f32.mrb[0].mxu0
    %v842 = vadd.f32 0.0, %v841
    %v843 = vpop.f32.mrb[0].mxu0
    %844 = vdwg.mxu0
    %846 = vrot.lane.b32.xlu0 %v842, 4
    %v847 = vpop.permute.xlu0 %846
    %v849 = vsel %vm149, %v669, %v847
    %v850 = vmul.f32 %v765, 0.5
    %852 = vrot.lane.b32.xlu0 %v21, 104
    %v853 = vpop.permute.xlu0 %852
    %855 = vrot.lane.b32.xlu0 %v27, 104
    %v856 = vpop.permute.xlu0 %855
    %v859 = vsel %vm29, %v496, 0
    %v862 = vsel %vm29, %v849, 0
    %864 = vmatprep.subr.mxu0 0.0
    %865 = vmatpush1.msra.mxu0 %v853
    %866 = vmatprep.subr.mxu0 0.0
    %867 = vmatpush1.msra.mxu0 0.0
    %868 = vmatprep.subr.mxu0 0.0
    %869 = vmatpush1.msra.mxu0 0.0
    %870 = vmatprep.subr.mxu0 0.0
    %871 = vmatpush1.msra.mxu0 0.0
    %872 = vmatprep.subr.mxu0 0.0
    %873 = vmatpush1.msra.mxu0 0.0
    %874 = vmatprep.subr.mxu0 0.0
    %875 = vmatpush1.msra.mxu0 0.0
    %876 = vmatprep.subr.mxu0 0.0
    %877 = vmatpush1.msra.mxu0 0.0
    %878 = vmatprep.subr.mxu0 0.0
    %879 = vmatpush1.msra.mxu0 0.0
    %880 = vmatprep.subr.mxu0 0.0
    %881 = vmatpush1.msra.mxu0 0.0
    %882 = vmatprep.subr.mxu0 0.0
    %883 = vmatpush1.msra.mxu0 0.0
    %884 = vmatprep.subr.mxu0 0.0
    %885 = vmatpush1.msra.mxu0 0.0
    %886 = vmatprep.subr.mxu0 0.0
    %887 = vmatpush1.msra.mxu0 0.0
    %888 = vmatprep.subr.mxu0 0.0
    %889 = vmatpush1.msra.mxu0 0.0
    %890 = vmatprep.subr.mxu0 0.0
    %891 = vmatpush1.msra.mxu0 0.0
    %892 = vmatprep.subr.mxu0 0.0
    %893 = vmatpush1.msra.mxu0 0.0
    %894 = vmatprep.subr.mxu0 0.0
    %895 = vmatpush1.msra.mxu0 0.0
    %896 = vmatprep.subr.mxu0 0.0
    %897 = vmatpush1.msra.mxu0 0.0
    %898 = vmatprep.subr.mxu0 0.0
    %899 = vmatpush1.msra.mxu0 0.0
    %900 = vmatprep.subr.mxu0 0.0
    %901 = vmatpush1.msra.mxu0 0.0
    %902 = vmatprep.subr.mxu0 0.0
    %903 = vmatpush1.msra.mxu0 0.0
    %904 = vmatprep.subr.mxu0 0.0
    %905 = vmatpush1.msra.mxu0 0.0
    %906 = vmatprep.subr.mxu0 0.0
    %907 = vmatpush1.msra.mxu0 0.0
    %908 = vmatprep.subr.mxu0 0.0
    %909 = vmatpush1.msra.mxu0 0.0
    %910 = vmatprep.subr.mxu0 0.0
    %911 = vmatpush1.msra.mxu0 0.0
    %912 = vmatprep.subr.mxu0 0.0
    %913 = vmatpush1.msra.mxu0 0.0
    %914 = vmatprep.subr.mxu0 0.0
    %915 = vmatpush1.msra.mxu0 0.0
    %916 = vmatprep.subr.mxu0 0.0
    %917 = vmatpush1.msra.mxu0 0.0
    %918 = vmatprep.subr.mxu0 0.0
    %919 = vmatpush1.msra.mxu0 0.0
    %920 = vmatprep.subr.mxu0 0.0
    %921 = vmatpush1.msra.mxu0 0.0
    %922 = vmatprep.subr.mxu0 0.0
    %923 = vmatpush1.msra.mxu0 0.0
    %924 = vmatprep.subr.mxu0 0.0
    %925 = vmatpush1.msra.mxu0 0.0
    %926 = vmatprep.subr.mxu0 0.0
    %927 = vmatpush1.msra.mxu0 0.0
    %928 = vmatprep.mubr.f32.mxu0 0.0
    %929 = vmatmul.mubr.f32.gmra.mrb[0].mxu0 %v859
    %v930 = vpop.f32.mrb[0].mxu0
    %v931 = vadd.f32 %v856, %v930
    %v932 = vpop.f32.mrb[0].mxu0
    %933 = vmatprep.mubr.f32.mxu0 0.0
    %934 = vmatmul.mubr.f32.gmra.mrb[0].mxu0 %v862
    %v935 = vpop.f32.mrb[0].mxu0
    %v936 = vadd.f32 %v856, %v935
    %v937 = vpop.f32.mrb[0].mxu0
    %938 = vdwg.mxu0
    %941 = vrot.lane.b32.xlu0 %v497, 8
    %v942 = vpop.permute.xlu0 %941
    %943 = vrot.lane.b32.xlu0 %v850, 8
    %v944 = vpop.permute.xlu0 %943
    %v947 = vsel %vm29, %v931, %v942
    %v948 = vsel %vm29, %v936, %v944
    %vm949 = vcmask 195584
    %950 = vst.msk [vmem:[#allocation2] sm:$0xff] %vm949, %v947
    %951 = vst.msk [vmem:[#allocation2 + $0x8] sm:$0xff] %vm949, %v948
    // Predicated region
    $region14: #{tpu_custom_call.1} parent=1 // pred_check
      _
    $region15: #{tpu_custom_call.1} parent=1 // pred_check_branch
      %953 = sbr.rel (0) target = $region17
    $region16: #{tpu_custom_call.1} parent=1 // pred_region
      %s955 = ssub.s32 256, 256
      %956 = vsyncadd [#allocation3], %s955
      %s957 = sshll.u32 [#allocation2], 4
      %s958 = int_to_ptr.vmem [resolvable:$true] %s957
      %963 = dma.vmem_to_hbm [thread:$0]  %s958, 256, %s3, [#allocation3], 128, 128, 8
    $region17: #{tpu_custom_call.1} parent=1 // pred_fallthru
      _
    // Predicated region
    $region18: #{tpu_custom_call.1} parent=1 // pred_check
      _
    $region19: #{tpu_custom_call.1} parent=1 // pred_check_branch
      %965 = sbr.rel (0) target = $region21
    $region20: #{tpu_custom_call.1} parent=1 // pred_region
      %966 = dma.done [#allocation3], 256
    $region21: #{tpu_custom_call.1} parent=1 // pred_fallthru
      _
    %967 = vsyncpa [#allocation3], 1

</llo_original>
